<compile_context>
chip_gen: v6e
topology: v6e:2x2x1
jax: 0.10.0
libtpu: 0.0.40
codegen_flags: <defaults>
</compile_context>

<pallas_src>
from typing import NamedTuple, Optional

import jax
import jax.numpy as jnp
from jax.experimental import pallas as pl
from jax.experimental.pallas import tpu as pltpu


# --------------------------------------------------------------------------- #
# Module arithmetic (exact replica of the PyTorch __init__)
# --------------------------------------------------------------------------- #
def _ffn_hidden_dim(dim: int, hidden_dim: int, multiple_of: int,
                    ffn_dim_multiplier: Optional[float] = None) -> int:
    hidden_dim = int(2 * hidden_dim / 3)
    if ffn_dim_multiplier is not None:
        hidden_dim = int(ffn_dim_multiplier * hidden_dim)
    hidden_dim = multiple_of * ((hidden_dim + multiple_of - 1) // multiple_of)
    return hidden_dim


def _round_up(x: int, m: int) -> int:
    return ((x + m - 1) // m) * m


# --------------------------------------------------------------------------- #
# Chip introspection / per-generation tile defaults
# --------------------------------------------------------------------------- #
def _chip_vmem_bytes() -> int:
    """Physical VMEM per TensorCore; robust fallbacks if introspection fails."""
    try:
        info = pltpu.get_tpu_info()
        v = getattr(info, "vmem_capacity_bytes", None)
        if v:
            return int(v)
    except Exception:
        pass
    try:
        kind = jax.devices()[0].device_kind.lower()
        if "v7" in kind:
            return 64 * 2**20
    except Exception:
        pass
    return 128 * 2**20  # v5e / v6e


def _auto_config():
    """Returns (tm_default, th_cap, weight_buffers) for this chip generation."""
    vmem = _chip_vmem_bytes()
    if vmem <= 80 * 2**20:
        # v7x: 64 MiB VMEM, 3.2 TB/s HBM -> smaller th, deeper weight buffering
        return 512, 256, 3
    # v5e / v6e: 128 MiB VMEM -> big row tile to beat the compute/BW ridge
    return 768, 512, 2


def _pick_tm(M: int, tm_default: int) -> int:
    tm_default = max(16, _round_up(tm_default, 16))
    if M >= 2 * tm_default:
        return tm_default
    # small/medium M (e.g. decode): aim for 2 row tiles so the "parallel" axis
    # spans both TensorCores; keep full bf16 sublane packing (multiple of 16).
    tm = _round_up(max(1, -(-M // 2)), 16)
    return max(16, min(tm, tm_default))


def _pick_th(hidden: int, th_cap: int):
    """Pick a hidden tile that divides `hidden` if at all possible.

    Returns (th, H_pad); H_pad != hidden only when no lane-aligned divisor
    exists (then the weights are padded ONCE at prep time)."""
    if hidden <= 128:
        return hidden, hidden  # full extent, trivially legal
    limit = min(th_cap, hidden)
    for granule in (256, 128):  # prefer full-MXU-width tiles
        best = 0
        t = granule
        while t <= limit:
            if hidden % t == 0:
                best = t
            t += granule
        if best:
            return best, hidden
    th = max(128, min(th_cap, 256))
    return th, _round_up(hidden, th)


# --------------------------------------------------------------------------- #
# One-time weight preparation (cast + transpose + optional pad)
# --------------------------------------------------------------------------- #
class FFNWeights(NamedTuple):
    w1t: jax.Array   # (dim, H_pad)  == w1.T, compute dtype
    w3t: jax.Array   # (dim, H_pad)  == w3.T, compute dtype
    w2t: jax.Array   # (H_pad, dim)  == w2.T, compute dtype
    hidden: int      # true (unpadded) hidden dim
    th: int          # hidden tile size


def prepare_ffn_weights(w1, w2, w3, *, compute_dtype=jnp.bfloat16,
                        th: Optional[int] = None) -> FFNWeights:
    """Do once at parameter-load time; keeps the per-call path cast/copy free."""
    hidden, dim = w1.shape
    assert w3.shape == (hidden, dim), "w3 must match w1 (hidden, dim)"
    assert w2.shape == (dim, hidden), "w2 must be (dim, hidden)"

    if th is None:
        _, th_cap, _ = _auto_config()
        th, H_pad = _pick_th(hidden, th_cap)
    else:
        assert th == hidden or th % 128 == 0, "th must be lane-aligned (128)"
        H_pad = _round_up(hidden, th)

    w1t = w1.T.astype(compute_dtype)   # (dim, hidden)
    w3t = w3.T.astype(compute_dtype)   # (dim, hidden)
    w2t = w2.T.astype(compute_dtype)   # (hidden, dim)
    if H_pad != hidden:
        w1t = jnp.pad(w1t, ((0, 0), (0, H_pad - hidden)))
        w3t = jnp.pad(w3t, ((0, 0), (0, H_pad - hidden)))
        w2t = jnp.pad(w2t, ((0, H_pad - hidden), (0, 0)))
    return FFNWeights(w1t, w3t, w2t, hidden, th)


# --------------------------------------------------------------------------- #
# Kernel
# --------------------------------------------------------------------------- #
def _ffn_kernel(x_ref, w1_ref, w3_ref, w2_ref, o_ref, acc_ref):
    # x_ref:   (tm, dim)  compute dtype (bf16), resident across the k axis
    # w1_ref:  (dim, th)  up-projection slice   (pre-transposed at prep time)
    # w3_ref:  (dim, th)  gate-projection slice
    # w2_ref:  (th, dim)  down-projection slice (pre-transposed)
    # o_ref:   (tm, dim)  output tile
    # acc_ref: (tm, dim)  f32 accumulator scratch, resident across the k axis
    k = pl.program_id(1)

    @pl.when(k == 0)
    def _init():
        acc_ref[...] = jnp.zeros_like(acc_ref)

    x = x_ref[...]
    h1 = jnp.dot(x, w1_ref[...], preferred_element_type=jnp.float32)   # (tm, th)
    h3 = jnp.dot(x, w3_ref[...], preferred_element_type=jnp.float32)   # (tm, th)
    gated = (jax.nn.silu(h1) * h3).astype(w2_ref.dtype)                # f32 math
    acc_ref[...] += jnp.dot(gated, w2_ref[...],
                            preferred_element_type=jnp.float32)        # (tm, dim)

    @pl.when(k == pl.num_programs(1) - 1)
    def _finalize():
        o_ref[...] = acc_ref[...].astype(o_ref.dtype)


# --------------------------------------------------------------------------- #
# Wrappers
# --------------------------------------------------------------------------- #
def feed_forward_prepared(x, weights: FFNWeights, *, tm: Optional[int] = None,
                          out_dtype=None, weight_buffers: Optional[int] = None):
    """x: (batch, seq, dim); weights from prepare_ffn_weights.

    Returns (batch, seq, dim) in out_dtype (default: the weight compute dtype,
    i.e. bf16 -> half the output VMEM + HBM writeback)."""
    batch, seq, dim = x.shape
    w1t, w3t, w2t, _, th = weights
    assert w1t.shape[0] == dim, "weight dim mismatch vs activations"
    H_pad = w1t.shape[1]
    compute_dtype = w1t.dtype
    if out_dtype is None:
        out_dtype = compute_dtype

    tm_default, _, wb_default = _auto_config()
    if weight_buffers is None:
        weight_buffers = wb_default

    M = batch * seq
    if tm is None:
        tm = _pick_tm(M, tm_default)
    assert tm % 16 == 0, "tm must be a multiple of 16 (bf16 sublane packing)"

    M_pad = _round_up(M, tm)
    x2d = x.reshape(M, dim).astype(compute_dtype)
    if M_pad != M:
        x2d = jnp.pad(x2d, ((0, M_pad - M), (0, 0)))

    grid = (M_pad // tm, H_pad // th)

    # VMEM budget: x (2x) + weights (weight_buffers x) + out (2x) + f32 acc,
    # capped by the actual chip VMEM minus headroom for compiler scratch.
    cdt = jnp.dtype(compute_dtype).itemsize
    odt = jnp.dtype(out_dtype).itemsize
    vmem_est = (2 * tm * dim * cdt                                   # x tiles
                + weight_buffers * (2 * dim * th + th * dim) * cdt   # w1/w3/w2
                + 2 * tm * dim * odt                                 # out tiles
                + tm * dim * 4)                                      # accumulator
    chip_vmem = _chip_vmem_bytes()
    vmem_limit = int(min(max(vmem_est * 5 // 4, 16 * 2**20),
                         chip_vmem - 8 * 2**20))

    def _make_call(use_buffered: bool):
        def wspec(shape, index_map):
            if use_buffered and weight_buffers != 2:
                return pl.BlockSpec(shape, index_map,
                                    pipeline_mode=pl.Buffered(weight_buffers))
            return pl.BlockSpec(shape, index_map)

        return pl.pallas_call(
            _ffn_kernel,
            out_shape=jax.ShapeDtypeStruct((M_pad, dim), out_dtype),
            grid_spec=pltpu.PrefetchScalarGridSpec(
                num_scalar_prefetch=0,
                grid=grid,
                in_specs=[
                    pl.BlockSpec((tm, dim), lambda i, k: (i, 0)),  # token rows
                    wspec((dim, th), lambda i, k: (0, k)),         # w1.T slice
                    wspec((dim, th), lambda i, k: (0, k)),         # w3.T slice
                    wspec((th, dim), lambda i, k: (k, 0)),         # w2.T slice
                ],
                out_specs=pl.BlockSpec((tm, dim), lambda i, k: (i, 0)),
                scratch_shapes=[pltpu.VMEM((tm, dim), jnp.float32)],
            ),
            compiler_params=pltpu.CompilerParams(
                dimension_semantics=("parallel", "arbitrary"),
                vmem_limit_bytes=vmem_limit,
            ),
        )

    try:
        out2d = _make_call(True)(x2d, w1t, w3t, w2t)
    except Exception:
        if weight_buffers == 2:
            raise
        # Fallback in case pipeline_mode / Buffered(n) is unsupported here.
        out2d = _make_call(False)(x2d, w1t, w3t, w2t)

    out2d = out2d[:M] if M_pad != M else out2d
    return out2d.reshape(batch, seq, dim)


def feed_forward(x, w1, w2, w3, *, compute_dtype=jnp.bfloat16,
                 tm: Optional[int] = None, th: Optional[int] = None,
                 out_dtype=None):
    """Convenience path (re-preps weights every call). In production call
    prepare_ffn_weights once and use feed_forward_prepared."""
    weights = prepare_ffn_weights(w1, w2, w3, compute_dtype=compute_dtype, th=th)
    return feed_forward_prepared(x, weights, tm=tm, out_dtype=out_dtype)


def feed_forward_ref(x, w1, w2, w3, *, compute_dtype=jnp.float32):
    # pure-JAX reference; compute_dtype=bf16 mirrors the kernel's precision
    xc = x.astype(compute_dtype)
    h1 = jnp.dot(xc, w1.astype(compute_dtype).T, preferred_element_type=jnp.float32)
    h3 = jnp.dot(xc, w3.astype(compute_dtype).T, preferred_element_type=jnp.float32)
    g = jax.nn.silu(h1) * h3
    out = jnp.dot(g.astype(compute_dtype), w2.astype(compute_dtype).T,
                  preferred_element_type=jnp.float32)
    return out


# --------------------------------------------------------------------------- #
# Self-test
# --------------------------------------------------------------------------- #
if __name__ == "__main__":
    # small but lane-dense config consistent with the module
    dim = 128
    multiple_of = 128
    hidden = _ffn_hidden_dim(dim, 4 * dim, multiple_of, None)   # -> 384
    batch, seq = 2, 8

    key = jax.random.PRNGKey(0)
    kx, k1, k2, k3 = jax.random.split(key, 4)
    x = jax.random.normal(kx, (batch, seq, dim), dtype=jnp.float32)
    # nn.Linear weight layout is (out_features, in_features)
    w1 = jax.random.normal(k1, (hidden, dim), dtype=jnp.float32) * (dim ** -0.5)
    w2 = jax.random.normal(k2, (dim, hidden), dtype=jnp.float32) * (hidden ** -0.5)
    w3 = jax.random.normal(k3, (hidden, dim), dtype=jnp.float32) * (dim ** -0.5)

    # one-time weight prep (cast + transpose; th auto-picked to divide hidden)
    weights = prepare_ffn_weights(w1, w2, w3, compute_dtype=jnp.bfloat16)

    out = feed_forward_prepared(x, weights)          # bf16 output by default
    jax.block_until_ready(out)
    assert out.shape == (batch, seq, dim)
    assert out.dtype == jnp.bfloat16

    # matched-precision reference (bf16 matmul inputs, f32 accumulation)
    ref_bf16 = feed_forward_ref(x, w1, w2, w3,
                                compute_dtype=jnp.bfloat16).astype(jnp.bfloat16)
    assert jnp.allclose(out.astype(jnp.float32), ref_bf16.astype(jnp.float32),
                        atol=2e-2, rtol=2e-2), "mismatch vs bf16 reference"

    # loose sanity check vs the pure-f32 PyTorch-semantics reference
    ref_f32 = feed_forward_ref(x, w1, w2, w3, compute_dtype=jnp.float32)
    assert jnp.allclose(out.astype(jnp.float32), ref_f32,
                        atol=1.5e-1, rtol=1.5e-1), "mismatch vs f32 reference"

    print("KERNEL_OK")
</pallas_src>

<mosaic_0001>
module attributes {stable_mosaic.version = 11 : i64} {
  func.func @_ffn_kernel(%arg0: i32, %arg1: i32, %arg2: memref<16x128xbf16, #tpu.memory_space<vmem>>, %arg3: memref<128x384xbf16, #tpu.memory_space<vmem>>, %arg4: memref<128x384xbf16, #tpu.memory_space<vmem>>, %arg5: memref<384x128xbf16, #tpu.memory_space<vmem>>, %arg6: memref<16x128xbf16, #tpu.memory_space<vmem>>, %arg7: memref<16x128xf32, #tpu.memory_space<vmem>>) attributes {dimension_semantics = [#tpu.dimension_semantics<parallel>, #tpu.dimension_semantics<arbitrary>], iteration_bounds = array<i64: 1, 1>, scalar_prefetch = 0 : i64, scratch_operands = 1 : i64, tpu.core_type = #tpu.core_type<tc>, window_params = [{transform_indices = @transform_0, window_bounds = array<i64: 16, 128>}, {transform_indices = @transform_1, window_bounds = array<i64: 128, 384>}, {transform_indices = @transform_2, window_bounds = array<i64: 128, 384>}, {transform_indices = @transform_3, window_bounds = array<i64: 384, 128>}, {transform_indices = @transform_4, window_bounds = array<i64: 16, 128>}]} {
    %c0_i32 = arith.constant 0 : i32
    %0 = arith.cmpi eq, %arg1, %c0_i32 : i32
    %1 = arith.extui %0 : i1 to i32
    %c0_i32_0 = arith.constant 0 : i32
    %2 = arith.cmpi ne, %1, %c0_i32_0 : i32
    scf.if %2 {
      %cst_17 = arith.constant 0.000000e+00 : f32
      %24 = vector.broadcast %cst_17 : f32 to vector<16x128xf32>
      %c0_18 = arith.constant 0 : index
      %c0_19 = arith.constant 0 : index
      %25 = vector.load %arg7[%c0_18, %c0_19] : memref<16x128xf32, #tpu.memory_space<vmem>>, vector<16x128xf32>
      tpu.vector_store %arg7[%c0_18, %c0_19], %24 {strides = array<i32>} : memref<16x128xf32, #tpu.memory_space<vmem>>, vector<16x128xf32>,
    } else {
    }
    %c0 = arith.constant 0 : index
    %c0_1 = arith.constant 0 : index
    %3 = vector.load %arg2[%c0, %c0_1] : memref<16x128xbf16, #tpu.memory_space<vmem>>, vector<16x128xbf16>
    %c0_2 = arith.constant 0 : index
    %c0_3 = arith.constant 0 : index
    %4 = vector.load %arg3[%c0_2, %c0_3] : memref<128x384xbf16, #tpu.memory_space<vmem>>, vector<128x384xbf16>
    %cst = arith.constant dense<0.000000e+00> : vector<16x384xf32>
    %5 = tpu.matmul %3, %4, %cst {dimension_numbers = #tpu.dot_dimension_numbers<[1], [0], [0], [1], [0, 0, 1, 1], [], []>} : vector<16x128xbf16>, vector<128x384xbf16>, vector<16x384xf32> -> vector<16x384xf32>
    %c0_4 = arith.constant 0 : index
    %c0_5 = arith.constant 0 : index
    %6 = vector.load %arg4[%c0_4, %c0_5] : memref<128x384xbf16, #tpu.memory_space<vmem>>, vector<128x384xbf16>
    %cst_6 = arith.constant dense<0.000000e+00> : vector<16x384xf32>
    %7 = tpu.matmul %3, %6, %cst_6 {dimension_numbers = #tpu.dot_dimension_numbers<[1], [0], [0], [1], [0, 0, 1, 1], [], []>} : vector<16x128xbf16>, vector<128x384xbf16>, vector<16x384xf32> -> vector<16x384xf32>
    %8 = arith.negf %5 : vector<16x384xf32>
    %9 = math.exp %8 : vector<16x384xf32>
    %cst_7 = arith.constant 1.000000e+00 : f32
    %10 = vector.broadcast %cst_7 : f32 to vector<16x384xf32>
    %11 = arith.addf %10, %9 : vector<16x384xf32>
    %12 = arith.divf %10, %11 : vector<16x384xf32>
    %13 = arith.mulf %5, %12 : vector<16x384xf32>
    %14 = arith.mulf %13, %7 : vector<16x384xf32>
    %15 = arith.truncf %14 : vector<16x384xf32> to vector<16x384xbf16>
    %c0_8 = arith.constant 0 : index
    %c0_9 = arith.constant 0 : index
    %16 = vector.load %arg7[%c0_8, %c0_9] : memref<16x128xf32, #tpu.memory_space<vmem>>, vector<16x128xf32>
    %c0_10 = arith.constant 0 : index
    %c0_11 = arith.constant 0 : index
    %17 = vector.load %arg5[%c0_10, %c0_11] : memref<384x128xbf16, #tpu.memory_space<vmem>>, vector<384x128xbf16>
    %cst_12 = arith.constant dense<0.000000e+00> : vector<16x128xf32>
    %18 = tpu.matmul %15, %17, %cst_12 {dimension_numbers = #tpu.dot_dimension_numbers<[1], [0], [0], [1], [0, 0, 1, 1], [], []>} : vector<16x384xbf16>, vector<384x128xbf16>, vector<16x128xf32> -> vector<16x128xf32>
    %19 = arith.addf %16, %18 : vector<16x128xf32>
    %c0_13 = arith.constant 0 : index
    %c0_14 = arith.constant 0 : index
    %20 = vector.load %arg7[%c0_13, %c0_14] : memref<16x128xf32, #tpu.memory_space<vmem>>, vector<16x128xf32>
    tpu.vector_store %arg7[%c0_13, %c0_14], %19 {strides = array<i32>} : memref<16x128xf32, #tpu.memory_space<vmem>>, vector<16x128xf32>,
    %c0_i32_15 = arith.constant 0 : i32
    %21 = arith.cmpi eq, %arg1, %c0_i32_15 : i32
    %22 = arith.extui %21 : i1 to i32
    %c0_i32_16 = arith.constant 0 : i32
    %23 = arith.cmpi ne, %22, %c0_i32_16 : i32
    scf.if %23 {
      %c0_17 = arith.constant 0 : index
      %c0_18 = arith.constant 0 : index
      %24 = vector.load %arg7[%c0_17, %c0_18] : memref<16x128xf32, #tpu.memory_space<vmem>>, vector<16x128xf32>
      %25 = arith.truncf %24 : vector<16x128xf32> to vector<16x128xbf16>
      %c0_19 = arith.constant 0 : index
      %c0_20 = arith.constant 0 : index
      %26 = vector.load %arg6[%c0_19, %c0_20] : memref<16x128xbf16, #tpu.memory_space<vmem>>, vector<16x128xbf16>
      tpu.vector_store %arg6[%c0_19, %c0_20], %25 {strides = array<i32>} : memref<16x128xbf16, #tpu.memory_space<vmem>>, vector<16x128xbf16>,
    } else {
    }
    return
  }
  func.func @transform_0(%arg0: i32, %arg1: i32) -> (i32, i32) {
    %c0_i32 = arith.constant 0 : i32
    %c0_i32_0 = arith.constant 0 : i32
    return %arg0, %c0_i32 : i32, i32
  }
  func.func @transform_1(%arg0: i32, %arg1: i32) -> (i32, i32) {
    %c0_i32 = arith.constant 0 : i32
    %c0_i32_0 = arith.constant 0 : i32
    return %c0_i32, %arg1 : i32, i32
  }
  func.func @transform_2(%arg0: i32, %arg1: i32) -> (i32, i32) {
    %c0_i32 = arith.constant 0 : i32
    %c0_i32_0 = arith.constant 0 : i32
    return %c0_i32, %arg1 : i32, i32
  }
  func.func @transform_3(%arg0: i32, %arg1: i32) -> (i32, i32) {
    %c0_i32 = arith.constant 0 : i32
    %c0_i32_0 = arith.constant 0 : i32
    return %arg1, %c0_i32 : i32, i32
  }
  func.func @transform_4(%arg0: i32, %arg1: i32) -> (i32, i32) {
    %c0_i32 = arith.constant 0 : i32
    %c0_i32_0 = arith.constant 0 : i32
    return %arg0, %c0_i32 : i32, i32
  }
}

</mosaic_0001>

<llo_original>
// kernel: tpu_custom_call.1
$region0: #{tpu_custom_call.1}
  #allocation0 [shape = 'u32[]', space=smem, size = 0x4, offset = 0x4, fixed_abs, tag = 'smem constant byte address 0x4 - core index']
  #allocation1 [shape = 'u32[144,128]{1,0:T(1,128)}', space=vmem, size = 0x12000, scoped, tag = 'internal scratch']
  #allocation2 [shape = 'f32[16,128]{1,0:T(8,128)}', space=vmem, size = 0x2000, scoped, tag = 'scratch operand']
  %s0 = inlined_call_operand.hbm [shape: bf16[16,128], index: 0, kind: input, shape index: {}]
  %s1 = inlined_call_operand.hbm [shape: bf16[128,384], index: 1, kind: input, shape index: {}]
  %s2 = inlined_call_operand.hbm [shape: bf16[128,384], index: 2, kind: input, shape index: {}]
  %s3 = inlined_call_operand.hbm [shape: bf16[384,128], index: 3, kind: input, shape index: {}]
  %s4 = inlined_call_operand.hbm [shape: bf16[16,128], index: 4, kind: output, shape index: {}]
  %s5 = sld [smem:[#allocation0]]
  $region50: #{tpu_custom_call.1} parent=0
    _
  %s7 = ssub.s32 1, %s5
  %s8 = scalar_select 0, %s7, %s5
  $region1: #{tpu_custom_call.1} parent=0
    #allocation3 [shape = 'u8[4096]{0}', space=vmem, size = 0x1000, scoped, tag = 'input window, operand 0, single buffered']
    #allocation4 [shape = 's32[1]{0}', space=sflag, size = 0x4, scoped, tag = 'scoped memory for tpu_custom_call.1']
    #allocation5 [shape = 's32[1]{0}', space=sflag, size = 0x4, scoped, tag = 'scoped memory for tpu_custom_call.1']
    #allocation6 [shape = 'u8[98304]{0}', space=vmem, size = 0x18000, scoped, tag = 'input window, operand 1, single buffered']
    #allocation7 [shape = 's32[1]{0}', space=sflag, size = 0x4, scoped, tag = 'scoped memory for tpu_custom_call.1']
    #allocation8 [shape = 'u8[98304]{0}', space=vmem, size = 0x18000, scoped, tag = 'input window, operand 2, single buffered']
    #allocation9 [shape = 'u8[98304]{0}', space=vmem, size = 0x18000, scoped, tag = 'input window, operand 3, single buffered']
    #allocation10 [shape = 's32[1]{0}', space=sflag, size = 0x4, scoped, tag = 'scoped memory for tpu_custom_call.1']
    #allocation11 [shape = 'u8[4096]{0}', space=vmem, size = 0x1000, scoped, tag = 'output window, operand 0, single buffered']
    %9 = vsyncpa [#allocation4], 0
    %10 = vsyncpa [#allocation7], 0
    %11 = vsyncpa [#allocation10], 0
    %12 = vsyncpa [#allocation5], 0
    // Predicated region
    $region2: #{tpu_custom_call.1} parent=1 // pred_check
      _
    $region3: #{tpu_custom_call.1} parent=1 // pred_check_branch
      %14 = sbr.rel (0) target = $region5
    $region4: #{tpu_custom_call.1} parent=1 // pred_region
      %s16 = ssub.s32 128, 128
      %17 = vsyncadd [#allocation4], %s16
      %s18 = sshll.u32 [#allocation3], 4
      %s19 = int_to_ptr.vmem [resolvable:$true] %s18
      %24 = dma.hbm_to_vmem [thread:$0]  %s0, 128, %s19, [#allocation4], 64, 64, 4
    $region5: #{tpu_custom_call.1} parent=1 // pred_fallthru
      _
    // Predicated region
    $region6: #{tpu_custom_call.1} parent=1 // pred_check
      _
    $region7: #{tpu_custom_call.1} parent=1 // pred_check_branch
      %26 = sbr.rel (0) target = $region9
    $region8: #{tpu_custom_call.1} parent=1 // pred_region
      %s28 = ssub.s32 3072, 3072
      %29 = vsyncadd [#allocation7], %s28
      %s30 = sshll.u32 [#allocation6], 4
      %s31 = int_to_ptr.vmem [resolvable:$true] %s30
      %36 = dma.hbm_to_vmem [thread:$0]  %s1, 3072, %s31, [#allocation7], 192, 192, 12
    $region9: #{tpu_custom_call.1} parent=1 // pred_fallthru
      _
    // Predicated region
    $region10: #{tpu_custom_call.1} parent=1 // pred_check
      _
    $region11: #{tpu_custom_call.1} parent=1 // pred_check_branch
      %38 = sbr.rel (0) target = $region13
    $region12: #{tpu_custom_call.1} parent=1 // pred_region
      %s40 = ssub.s32 3072, 3072
      %41 = vsyncadd [#allocation7], %s40
      %s42 = sshll.u32 [#allocation8], 4
      %s43 = int_to_ptr.vmem [resolvable:$true] %s42
      %48 = dma.hbm_to_vmem [thread:$0]  %s2, 3072, %s43, [#allocation7], 192, 192, 12
    $region13: #{tpu_custom_call.1} parent=1 // pred_fallthru
      _
    // Predicated region
    $region14: #{tpu_custom_call.1} parent=1 // pred_check
      _
    $region15: #{tpu_custom_call.1} parent=1 // pred_check_branch
      %50 = sbr.rel (0) target = $region17
    $region16: #{tpu_custom_call.1} parent=1 // pred_region
      %s52 = ssub.s32 3072, 3072
      %53 = vsyncadd [#allocation10], %s52
      %s54 = sshll.u32 [#allocation9], 4
      %s55 = int_to_ptr.vmem [resolvable:$true] %s54
      %60 = dma.hbm_to_vmem [thread:$0]  %s3, 3072, %s55, [#allocation10], 64, 64, 4
    $region17: #{tpu_custom_call.1} parent=1 // pred_fallthru
      _
    // Predicated region
    $region18: #{tpu_custom_call.1} parent=1 // pred_check
      _
    $region19: #{tpu_custom_call.1} parent=1 // pred_check_branch
      %62 = sbr.rel (0) target = $region21
    $region20: #{tpu_custom_call.1} parent=1 // pred_region
      %63 = dma.done [#allocation4], 128
    $region21: #{tpu_custom_call.1} parent=1 // pred_fallthru
      _
    // Predicated region
    $region22: #{tpu_custom_call.1} parent=1 // pred_check
      _
    $region23: #{tpu_custom_call.1} parent=1 // pred_check_branch
      %65 = sbr.rel (0) target = $region25
    $region24: #{tpu_custom_call.1} parent=1 // pred_region
      %66 = dma.done [#allocation7], 3072
    $region25: #{tpu_custom_call.1} parent=1 // pred_fallthru
      _
    // Predicated region
    $region26: #{tpu_custom_call.1} parent=1 // pred_check
      _
    $region27: #{tpu_custom_call.1} parent=1 // pred_check_branch
      %68 = sbr.rel (0) target = $region29
    $region28: #{tpu_custom_call.1} parent=1 // pred_region
      %69 = dma.done [#allocation7], 3072
    $region29: #{tpu_custom_call.1} parent=1 // pred_fallthru
      _
    // Predicated region
    $region30: #{tpu_custom_call.1} parent=1 // pred_check
      _
    $region31: #{tpu_custom_call.1} parent=1 // pred_check_branch
      %71 = sbr.rel (0) target = $region33
    $region32: #{tpu_custom_call.1} parent=1 // pred_region
      %72 = dma.done [#allocation10], 3072
    $region33: #{tpu_custom_call.1} parent=1 // pred_fallthru
      _
    %p74 = scmp.eq.s32.totalorder 0, 0
    // Predicated region
    $region34: #{tpu_custom_call.1} parent=1 // pred_check
      %p75 = pneg %p74
    $region35: #{tpu_custom_call.1} parent=1 // pred_check_branch
      %77 = sbr.rel (%p75) target = $region37
    $region36: #{tpu_custom_call.1} parent=1 // pred_region
      %78 = vst [vmem:[#allocation2] sm:$0xff] 0.0
      %79 = vst [vmem:[#allocation2 + $0x8] sm:$0xff] 0.0
    $region37: #{tpu_custom_call.1} parent=1 // pred_fallthru
      _
    %v80 = vld [vmem:[#allocation3] sm:$0xf]
    %v81 = vld [vmem:[#allocation3 + $0x4] sm:$0xf]
    %v82 = vld [vmem:[#allocation6] sm:$0xff]
    %v83 = vld [vmem:[#allocation6 + $0x8] sm:$0xf]
    %v84 = vld [vmem:[#allocation6 + $0xc] sm:$0xff]
    %v85 = vld [vmem:[#allocation6 + $0x14] sm:$0xf]
    %v86 = vld [vmem:[#allocation6 + $0x18] sm:$0xff]
    %v87 = vld [vmem:[#allocation6 + $0x20] sm:$0xf]
    %v88 = vld [vmem:[#allocation6 + $0x24] sm:$0xff]
    %v89 = vld [vmem:[#allocation6 + $0x2c] sm:$0xf]
    %v90 = vld [vmem:[#allocation6 + $0x30] sm:$0xff]
    %v91 = vld [vmem:[#allocation6 + $0x38] sm:$0xf]
    %v92 = vld [vmem:[#allocation6 + $0x3c] sm:$0xff]
    %v93 = vld [vmem:[#allocation6 + $0x44] sm:$0xf]
    %v94 = vld [vmem:[#allocation6 + $0x48] sm:$0xff]
    %v95 = vld [vmem:[#allocation6 + $0x50] sm:$0xf]
    %v96 = vld [vmem:[#allocation6 + $0x54] sm:$0xff]
    %v97 = vld [vmem:[#allocation6 + $0x5c] sm:$0xf]
    %v98 = vld [vmem:[#allocation6 + $0x60] sm:$0xff]
    %v99 = vld [vmem:[#allocation6 + $0x68] sm:$0xf]
    %v100 = vld [vmem:[#allocation6 + $0x6c] sm:$0xff]
    %v101 = vld [vmem:[#allocation6 + $0x74] sm:$0xf]
    %v102 = vld [vmem:[#allocation6 + $0x78] sm:$0xff]
    %v103 = vld [vmem:[#allocation6 + $0x80] sm:$0xf]
    %v104 = vld [vmem:[#allocation6 + $0x84] sm:$0xff]
    %v105 = vld [vmem:[#allocation6 + $0x8c] sm:$0xf]
    %v106 = vld [vmem:[#allocation6 + $0x90] sm:$0xff]
    %v107 = vld [vmem:[#allocation6 + $0x98] sm:$0xf]
    %v108 = vld [vmem:[#allocation6 + $0x9c] sm:$0xff]
    %v109 = vld [vmem:[#allocation6 + $0xa4] sm:$0xf]
    %v110 = vld [vmem:[#allocation6 + $0xa8] sm:$0xff]
    %v111 = vld [vmem:[#allocation6 + $0xb0] sm:$0xf]
    %v112 = vld [vmem:[#allocation6 + $0xb4] sm:$0xff]
    %v113 = vld [vmem:[#allocation6 + $0xbc] sm:$0xf]
    %v116 = vunpack.c.l.b16 %v80
    %v117 = vunpack.c.l.b16 %v81
    %v118 = vpack.c.b16 %v117, %v116
    %v152 = vunpack.c.l.b16 %v82
    %v153 = vunpack.c.h.b16 %v82
    %v154 = vunpack.c.l.b16 %v83
    %v155 = vunpack.c.l.b16 %v84
    %v156 = vunpack.c.h.b16 %v84
    %v157 = vunpack.c.l.b16 %v85
    %v158 = vunpack.c.l.b16 %v86
    %v159 = vunpack.c.h.b16 %v86
    %v160 = vunpack.c.l.b16 %v87
    %v161 = vunpack.c.l.b16 %v88
    %v162 = vunpack.c.h.b16 %v88
    %v163 = vunpack.c.l.b16 %v89
    %v164 = vunpack.c.l.b16 %v90
    %v165 = vunpack.c.h.b16 %v90
    %v166 = vunpack.c.l.b16 %v91
    %v167 = vunpack.c.l.b16 %v92
    %v168 = vunpack.c.h.b16 %v92
    %v169 = vunpack.c.l.b16 %v93
    %v170 = vunpack.c.l.b16 %v94
    %v171 = vunpack.c.h.b16 %v94
    %v172 = vunpack.c.l.b16 %v95
    %v173 = vunpack.c.l.b16 %v96
    %v174 = vunpack.c.h.b16 %v96
    %v175 = vunpack.c.l.b16 %v97
    %v176 = vunpack.c.l.b16 %v98
    %v177 = vunpack.c.h.b16 %v98
    %v178 = vunpack.c.l.b16 %v99
    %v179 = vunpack.c.l.b16 %v100
    %v180 = vunpack.c.h.b16 %v100
    %v181 = vunpack.c.l.b16 %v101
    %v182 = vunpack.c.l.b16 %v102
    %v183 = vunpack.c.h.b16 %v102
    %v184 = vunpack.c.l.b16 %v103
    %v185 = vunpack.c.l.b16 %v104
    %v186 = vunpack.c.h.b16 %v104
    %v187 = vunpack.c.l.b16 %v105
    %v188 = vunpack.c.l.b16 %v106
    %v189 = vunpack.c.h.b16 %v106
    %v190 = vunpack.c.l.b16 %v107
    %v191 = vunpack.c.l.b16 %v108
    %v192 = vunpack.c.h.b16 %v108
    %v193 = vunpack.c.l.b16 %v109
    %v194 = vunpack.c.l.b16 %v110
    %v195 = vunpack.c.h.b16 %v110
    %v196 = vunpack.c.l.b16 %v111
    %v197 = vunpack.c.l.b16 %v112
    %v198 = vunpack.c.h.b16 %v112
    %v199 = vunpack.c.l.b16 %v113
    %v200 = vpack.c.b16 %v155, %v152
    %v201 = vpack.c.b16 %v156, %v153
    %v202 = vpack.c.b16 %v157, %v154
    %v203 = vpack.c.b16 %v161, %v158
    %v204 = vpack.c.b16 %v162, %v159
    %v205 = vpack.c.b16 %v163, %v160
    %v206 = vpack.c.b16 %v167, %v164
    %v207 = vpack.c.b16 %v168, %v165
    %v208 = vpack.c.b16 %v169, %v166
    %v209 = vpack.c.b16 %v173, %v170
    %v210 = vpack.c.b16 %v174, %v171
    %v211 = vpack.c.b16 %v175, %v172
    %v212 = vpack.c.b16 %v179, %v176
    %v213 = vpack.c.b16 %v180, %v177
    %v214 = vpack.c.b16 %v181, %v178
    %v215 = vpack.c.b16 %v185, %v182
    %v216 = vpack.c.b16 %v186, %v183
    %v217 = vpack.c.b16 %v187, %v184
    %v218 = vpack.c.b16 %v191, %v188
    %v219 = vpack.c.b16 %v192, %v189
    %v220 = vpack.c.b16 %v193, %v190
    %v221 = vpack.c.b16 %v197, %v194
    %v222 = vpack.c.b16 %v198, %v195
    %v223 = vpack.c.b16 %v199, %v196
    %248 = vmatprep.subr.bf16.mxu0 %v222
    %249 = vmatpush1.bf16.msra.mxu0 %v221
    %250 = vmatprep.subr.bf16.mxu0 %v219
    %251 = vmatpush1.bf16.msra.mxu0 %v218
    %252 = vmatprep.subr.bf16.mxu0 %v216
    %253 = vmatpush1.bf16.msra.mxu0 %v215
    %254 = vmatprep.subr.bf16.mxu0 %v213
    %255 = vmatpush1.bf16.msra.mxu0 %v212
    %256 = vmatprep.subr.bf16.mxu0 %v210
    %257 = vmatpush1.bf16.msra.mxu0 %v209
    %258 = vmatprep.subr.bf16.mxu0 %v207
    %259 = vmatpush1.bf16.msra.mxu0 %v206
    %260 = vmatprep.subr.bf16.mxu0 %v204
    %261 = vmatpush1.bf16.msra.mxu0 %v203
    %262 = vmatprep.subr.bf16.mxu0 %v201
    %263 = vmatpush1.bf16.msra.mxu0 %v200
    %264 = vmatprep.subr.bf16.mxu0 0
    %265 = vmatpush2.bf16.msra.mxu0 0
    %266 = vmatprep.subr.bf16.mxu0 0
    %267 = vmatpush2.bf16.msra.mxu0 0
    %268 = vmatprep.subr.bf16.mxu0 0
    %269 = vmatpush2.bf16.msra.mxu0 0
    %270 = vmatprep.subr.bf16.mxu0 0
    %271 = vmatpush2.bf16.msra.mxu0 0
    %272 = vmatprep.subr.bf16.mxu0 0
    %273 = vmatpush2.bf16.msra.mxu0 0
    %274 = vmatprep.subr.bf16.mxu0 0
    %275 = vmatpush2.bf16.msra.mxu0 0
    %276 = vmatprep.subr.bf16.mxu0 0
    %277 = vmatpush2.bf16.msra.mxu0 0
    %278 = vmatprep.subr.bf16.mxu0 0
    %279 = vmatpush2.bf16.msra.mxu0 0
    %280 = vmatprep.mubr.bf16.mxu0 0
    %281 = vmatmul.mubr.bf16.gmra.mxu0 %v118
    %v282 = vpop.f32.mrf.mxu0
    %v283 = vadd.f32 0.0, %v282
    %v284 = vpop.f32.mrf.mxu0
    %v285 = vadd.f32 0.0, %v284
    %v286 = vpop.f32.mrf.mxu0
    %v287 = vadd.f32 0.0, %v286
    %v288 = vpop.f32.mrf.mxu0
    %v289 = vadd.f32 0.0, %v288
    %290 = vdwg.mxu0
    %291 = vmatprep.subr.bf16.mxu0 0
    %292 = vmatpush1.bf16.msra.mxu0 %v223
    %293 = vmatprep.subr.bf16.mxu0 0
    %294 = vmatpush1.bf16.msra.mxu0 %v220
    %295 = vmatprep.subr.bf16.mxu0 0
    %296 = vmatpush1.bf16.msra.mxu0 %v217
    %297 = vmatprep.subr.bf16.mxu0 0
    %298 = vmatpush1.bf16.msra.mxu0 %v214
    %299 = vmatprep.subr.bf16.mxu0 0
    %300 = vmatpush1.bf16.msra.mxu0 %v211
    %301 = vmatprep.subr.bf16.mxu0 0
    %302 = vmatpush1.bf16.msra.mxu0 %v208
    %303 = vmatprep.subr.bf16.mxu0 0
    %304 = vmatpush1.bf16.msra.mxu0 %v205
    %305 = vmatprep.subr.bf16.mxu0 0
    %306 = vmatpush1.bf16.msra.mxu0 %v202
    %307 = vmatprep.subr.bf16.mxu0 0
    %308 = vmatpush2.bf16.msra.mxu0 0
    %309 = vmatprep.subr.bf16.mxu0 0
    %310 = vmatpush2.bf16.msra.mxu0 0
    %311 = vmatprep.subr.bf16.mxu0 0
    %312 = vmatpush2.bf16.msra.mxu0 0
    %313 = vmatprep.subr.bf16.mxu0 0
    %314 = vmatpush2.bf16.msra.mxu0 0
    %315 = vmatprep.subr.bf16.mxu0 0
    %316 = vmatpush2.bf16.msra.mxu0 0
    %317 = vmatprep.subr.bf16.mxu0 0
    %318 = vmatpush2.bf16.msra.mxu0 0
    %319 = vmatprep.subr.bf16.mxu0 0
    %320 = vmatpush2.bf16.msra.mxu0 0
    %321 = vmatprep.subr.bf16.mxu0 0
    %322 = vmatpush2.bf16.msra.mxu0 0
    %323 = vmatprep.mubr.bf16.mxu0 0
    %324 = vmatmul.mubr.bf16.gmra.mxu0 %v118
    %v325 = vpop.f32.mrf.mxu0
    %v326 = vadd.f32 0.0, %v325
    %v327 = vpop.f32.mrf.mxu0
    %v328 = vpop.f32.mrf.mxu0
    %v329 = vadd.f32 0.0, %v328
    %v330 = vpop.f32.mrf.mxu0
    %331 = vdwg.mxu0
    %v332 = vld [vmem:[#allocation8] sm:$0xff]
    %v333 = vld [vmem:[#allocation8 + $0x8] sm:$0xf]
    %v334 = vld [vmem:[#allocation8 + $0xc] sm:$0xff]
    %v335 = vld [vmem:[#allocation8 + $0x14] sm:$0xf]
    %v336 = vld [vmem:[#allocation8 + $0x18] sm:$0xff]
    %v337 = vld [vmem:[#allocation8 + $0x20] sm:$0xf]
    %v338 = vld [vmem:[#allocation8 + $0x24] sm:$0xff]
    %v339 = vld [vmem:[#allocation8 + $0x2c] sm:$0xf]
    %v340 = vld [vmem:[#allocation8 + $0x30] sm:$0xff]
    %v341 = vld [vmem:[#allocation8 + $0x38] sm:$0xf]
    %v342 = vld [vmem:[#allocation8 + $0x3c] sm:$0xff]
    %v343 = vld [vmem:[#allocation8 + $0x44] sm:$0xf]
    %v344 = vld [vmem:[#allocation8 + $0x48] sm:$0xff]
    %v345 = vld [vmem:[#allocation8 + $0x50] sm:$0xf]
    %v346 = vld [vmem:[#allocation8 + $0x54] sm:$0xff]
    %v347 = vld [vmem:[#allocation8 + $0x5c] sm:$0xf]
    %v348 = vld [vmem:[#allocation8 + $0x60] sm:$0xff]
    %v349 = vld [vmem:[#allocation8 + $0x68] sm:$0xf]
    %v350 = vld [vmem:[#allocation8 + $0x6c] sm:$0xff]
    %v351 = vld [vmem:[#allocation8 + $0x74] sm:$0xf]
    %v352 = vld [vmem:[#allocation8 + $0x78] sm:$0xff]
    %v353 = vld [vmem:[#allocation8 + $0x80] sm:$0xf]
    %v354 = vld [vmem:[#allocation8 + $0x84] sm:$0xff]
    %v355 = vld [vmem:[#allocation8 + $0x8c] sm:$0xf]
    %v356 = vld [vmem:[#allocation8 + $0x90] sm:$0xff]
    %v357 = vld [vmem:[#allocation8 + $0x98] sm:$0xf]
    %v358 = vld [vmem:[#allocation8 + $0x9c] sm:$0xff]
    %v359 = vld [vmem:[#allocation8 + $0xa4] sm:$0xf]
    %v360 = vld [vmem:[#allocation8 + $0xa8] sm:$0xff]
    %v361 = vld [vmem:[#allocation8 + $0xb0] sm:$0xf]
    %v362 = vld [vmem:[#allocation8 + $0xb4] sm:$0xff]
    %v363 = vld [vmem:[#allocation8 + $0xbc] sm:$0xf]
    %v396 = vunpack.c.l.b16 %v332
    %v397 = vunpack.c.h.b16 %v332
    %v398 = vunpack.c.l.b16 %v333
    %v399 = vunpack.c.l.b16 %v334
    %v400 = vunpack.c.h.b16 %v334
    %v401 = vunpack.c.l.b16 %v335
    %v402 = vunpack.c.l.b16 %v336
    %v403 = vunpack.c.h.b16 %v336
    %v404 = vunpack.c.l.b16 %v337
    %v405 = vunpack.c.l.b16 %v338
    %v406 = vunpack.c.h.b16 %v338
    %v407 = vunpack.c.l.b16 %v339
    %v408 = vunpack.c.l.b16 %v340
    %v409 = vunpack.c.h.b16 %v340
    %v410 = vunpack.c.l.b16 %v341
    %v411 = vunpack.c.l.b16 %v342
    %v412 = vunpack.c.h.b16 %v342
    %v413 = vunpack.c.l.b16 %v343
    %v414 = vunpack.c.l.b16 %v344
    %v415 = vunpack.c.h.b16 %v344
    %v416 = vunpack.c.l.b16 %v345
    %v417 = vunpack.c.l.b16 %v346
    %v418 = vunpack.c.h.b16 %v346
    %v419 = vunpack.c.l.b16 %v347
    %v420 = vunpack.c.l.b16 %v348
    %v421 = vunpack.c.h.b16 %v348
    %v422 = vunpack.c.l.b16 %v349
    %v423 = vunpack.c.l.b16 %v350
    %v424 = vunpack.c.h.b16 %v350
    %v425 = vunpack.c.l.b16 %v351
    %v426 = vunpack.c.l.b16 %v352
    %v427 = vunpack.c.h.b16 %v352
    %v428 = vunpack.c.l.b16 %v353
    %v429 = vunpack.c.l.b16 %v354
    %v430 = vunpack.c.h.b16 %v354
    %v431 = vunpack.c.l.b16 %v355
    %v432 = vunpack.c.l.b16 %v356
    %v433 = vunpack.c.h.b16 %v356
    %v434 = vunpack.c.l.b16 %v357
    %v435 = vunpack.c.l.b16 %v358
    %v436 = vunpack.c.h.b16 %v358
    %v437 = vunpack.c.l.b16 %v359
    %v438 = vunpack.c.l.b16 %v360
    %v439 = vunpack.c.h.b16 %v360
    %v440 = vunpack.c.l.b16 %v361
    %v441 = vunpack.c.l.b16 %v362
    %v442 = vunpack.c.h.b16 %v362
    %v443 = vunpack.c.l.b16 %v363
    %v444 = vpack.c.b16 %v399, %v396
    %v445 = vpack.c.b16 %v400, %v397
    %v446 = vpack.c.b16 %v401, %v398
    %v447 = vpack.c.b16 %v405, %v402
    %v448 = vpack.c.b16 %v406, %v403
    %v449 = vpack.c.b16 %v407, %v404
    %v450 = vpack.c.b16 %v411, %v408
    %v451 = vpack.c.b16 %v412, %v409
    %v452 = vpack.c.b16 %v413, %v410
    %v453 = vpack.c.b16 %v417, %v414
    %v454 = vpack.c.b16 %v418, %v415
    %v455 = vpack.c.b16 %v419, %v416
    %v456 = vpack.c.b16 %v423, %v420
    %v457 = vpack.c.b16 %v424, %v421
    %v458 = vpack.c.b16 %v425, %v422
    %v459 = vpack.c.b16 %v429, %v426
    %v460 = vpack.c.b16 %v430, %v427
    %v461 = vpack.c.b16 %v431, %v428
    %v462 = vpack.c.b16 %v435, %v432
    %v463 = vpack.c.b16 %v436, %v433
    %v464 = vpack.c.b16 %v437, %v434
    %v465 = vpack.c.b16 %v441, %v438
    %v466 = vpack.c.b16 %v442, %v439
    %v467 = vpack.c.b16 %v443, %v440
    %492 = vmatprep.subr.bf16.mxu0 %v466
    %493 = vmatpush1.bf16.msra.mxu0 %v465
    %494 = vmatprep.subr.bf16.mxu0 %v463
    %495 = vmatpush1.bf16.msra.mxu0 %v462
    %496 = vmatprep.subr.bf16.mxu0 %v460
    %497 = vmatpush1.bf16.msra.mxu0 %v459
    %498 = vmatprep.subr.bf16.mxu0 %v457
    %499 = vmatpush1.bf16.msra.mxu0 %v456
    %500 = vmatprep.subr.bf16.mxu0 %v454
    %501 = vmatpush1.bf16.msra.mxu0 %v453
    %502 = vmatprep.subr.bf16.mxu0 %v451
    %503 = vmatpush1.bf16.msra.mxu0 %v450
    %504 = vmatprep.subr.bf16.mxu0 %v448
    %505 = vmatpush1.bf16.msra.mxu0 %v447
    %506 = vmatprep.subr.bf16.mxu0 %v445
    %507 = vmatpush1.bf16.msra.mxu0 %v444
    %508 = vmatprep.subr.bf16.mxu0 0
    %509 = vmatpush2.bf16.msra.mxu0 0
    %510 = vmatprep.subr.bf16.mxu0 0
    %511 = vmatpush2.bf16.msra.mxu0 0
    %512 = vmatprep.subr.bf16.mxu0 0
    %513 = vmatpush2.bf16.msra.mxu0 0
    %514 = vmatprep.subr.bf16.mxu0 0
    %515 = vmatpush2.bf16.msra.mxu0 0
    %516 = vmatprep.subr.bf16.mxu0 0
    %517 = vmatpush2.bf16.msra.mxu0 0
    %518 = vmatprep.subr.bf16.mxu0 0
    %519 = vmatpush2.bf16.msra.mxu0 0
    %520 = vmatprep.subr.bf16.mxu0 0
    %521 = vmatpush2.bf16.msra.mxu0 0
    %522 = vmatprep.subr.bf16.mxu0 0
    %523 = vmatpush2.bf16.msra.mxu0 0
    %524 = vmatprep.mubr.bf16.mxu0 0
    %525 = vmatmul.mubr.bf16.gmra.mxu0 %v118
    %v526 = vpop.f32.mrf.mxu0
    %v527 = vadd.f32 0.0, %v526
    %v528 = vpop.f32.mrf.mxu0
    %v529 = vadd.f32 0.0, %v528
    %v530 = vpop.f32.mrf.mxu0
    %v531 = vadd.f32 0.0, %v530
    %v532 = vpop.f32.mrf.mxu0
    %v533 = vadd.f32 0.0, %v532
    %534 = vdwg.mxu0
    %535 = vmatprep.subr.bf16.mxu0 0
    %536 = vmatpush1.bf16.msra.mxu0 %v467
    %537 = vmatprep.subr.bf16.mxu0 0
    %538 = vmatpush1.bf16.msra.mxu0 %v464
    %539 = vmatprep.subr.bf16.mxu0 0
    %540 = vmatpush1.bf16.msra.mxu0 %v461
    %541 = vmatprep.subr.bf16.mxu0 0
    %542 = vmatpush1.bf16.msra.mxu0 %v458
    %543 = vmatprep.subr.bf16.mxu0 0
    %544 = vmatpush1.bf16.msra.mxu0 %v455
    %545 = vmatprep.subr.bf16.mxu0 0
    %546 = vmatpush1.bf16.msra.mxu0 %v452
    %547 = vmatprep.subr.bf16.mxu0 0
    %548 = vmatpush1.bf16.msra.mxu0 %v449
    %549 = vmatprep.subr.bf16.mxu0 0
    %550 = vmatpush1.bf16.msra.mxu0 %v446
    %551 = vmatprep.subr.bf16.mxu0 0
    %552 = vmatpush2.bf16.msra.mxu0 0
    %553 = vmatprep.subr.bf16.mxu0 0
    %554 = vmatpush2.bf16.msra.mxu0 0
    %555 = vmatprep.subr.bf16.mxu0 0
    %556 = vmatpush2.bf16.msra.mxu0 0
    %557 = vmatprep.subr.bf16.mxu0 0
    %558 = vmatpush2.bf16.msra.mxu0 0
    %559 = vmatprep.subr.bf16.mxu0 0
    %560 = vmatpush2.bf16.msra.mxu0 0
    %561 = vmatprep.subr.bf16.mxu0 0
    %562 = vmatpush2.bf16.msra.mxu0 0
    %563 = vmatprep.subr.bf16.mxu0 0
    %564 = vmatpush2.bf16.msra.mxu0 0
    %565 = vmatprep.subr.bf16.mxu0 0
    %566 = vmatpush2.bf16.msra.mxu0 0
    %567 = vmatprep.mubr.bf16.mxu0 0
    %568 = vmatmul.mubr.bf16.gmra.mxu0 %v118
    %v569 = vpop.f32.mrf.mxu0
    %v570 = vadd.f32 0.0, %v569
    %v571 = vpop.f32.mrf.mxu0
    %v572 = vpop.f32.mrf.mxu0
    %v573 = vadd.f32 0.0, %v572
    %v574 = vpop.f32.mrf.mxu0
    %575 = vdwg.mxu0
    %v576 = vxor.u32 %v283, 2147483648
    %v577 = vxor.u32 %v285, 2147483648
    %v578 = vxor.u32 %v326, 2147483648
    %v579 = vxor.u32 %v287, 2147483648
    %v580 = vxor.u32 %v289, 2147483648
    %v581 = vxor.u32 %v329, 2147483648
    %v582 = vmul.f32 %v576, 1.442695
    %v583 = vpow.pop %v582
    %v584 = vmul.f32 %v577, 1.442695
    %v585 = vpow.pop %v584
    %v586 = vmul.f32 %v578, 1.442695
    %v587 = vpow.pop %v586
    %v588 = vmul.f32 %v579, 1.442695
    %v589 = vpow.pop %v588
    %v590 = vmul.f32 %v580, 1.442695
    %v591 = vpow.pop %v590
    %v592 = vmul.f32 %v581, 1.442695
    %v593 = vpow.pop %v592
    %v594 = vadd.f32 %v583, 1.0
    %v595 = vadd.f32 %v585, 1.0
    %v596 = vadd.f32 %v587, 1.0
    %v597 = vadd.f32 %v589, 1.0
    %v598 = vadd.f32 %v591, 1.0
    %v599 = vadd.f32 %v593, 1.0
    %v600 = vrcp.pop %v594
    %v601 = vmul.f32 1.0, %v600
    %v602 = vrcp.pop %v595
    %v603 = vmul.f32 1.0, %v602
    %v604 = vrcp.pop %v596
    %v605 = vmul.f32 1.0, %v604
    %v606 = vrcp.pop %v597
    %v607 = vmul.f32 1.0, %v606
    %v608 = vrcp.pop %v598
    %v609 = vmul.f32 1.0, %v608
    %v610 = vrcp.pop %v599
    %v611 = vmul.f32 1.0, %v610
    %v612 = vmul.f32 %v283, %v601
    %v613 = vmul.f32 %v285, %v603
    %v614 = vmul.f32 %v326, %v605
    %v615 = vmul.f32 %v287, %v607
    %v616 = vmul.f32 %v289, %v609
    %v617 = vmul.f32 %v329, %v611
    %v618 = vmul.f32 %v612, %v527
    %v619 = vmul.f32 %v613, %v529
    %v620 = vmul.f32 %v614, %v570
    %v621 = vmul.f32 %v615, %v531
    %v622 = vmul.f32 %v616, %v533
    %v623 = vmul.f32 %v617, %v573
    %v624 = vpack.c.bf16 %v621, %v618
    %v625 = vpack.c.bf16 %v622, %v619
    %v626 = vpack.c.bf16 %v623, %v620
    %v627 = vld [vmem:[#allocation2] sm:$0xff]
    %v628 = vld [vmem:[#allocation2 + $0x8] sm:$0xff]
    %v629 = vld [vmem:[#allocation9] sm:$0xf]
    %v630 = vld [vmem:[#allocation9 + $0x4] sm:$0xf]
    %v631 = vld [vmem:[#allocation9 + $0x8] sm:$0xf]
    %v632 = vld [vmem:[#allocation9 + $0xc] sm:$0xf]
    %v633 = vld [vmem:[#allocation9 + $0x10] sm:$0xf]
    %v634 = vld [vmem:[#allocation9 + $0x14] sm:$0xf]
    %v635 = vld [vmem:[#allocation9 + $0x18] sm:$0xf]
    %v636 = vld [vmem:[#allocation9 + $0x1c] sm:$0xf]
    %v637 = vld [vmem:[#allocation9 + $0x20] sm:$0xf]
    %v638 = vld [vmem:[#allocation9 + $0x24] sm:$0xf]
    %v639 = vld [vmem:[#allocation9 + $0x28] sm:$0xf]
    %v640 = vld [vmem:[#allocation9 + $0x2c] sm:$0xf]
    %v641 = vld [vmem:[#allocation9 + $0x30] sm:$0xf]
    %v642 = vld [vmem:[#allocation9 + $0x34] sm:$0xf]
    %v643 = vld [vmem:[#allocation9 + $0x38] sm:$0xf]
    %v644 = vld [vmem:[#allocation9 + $0x3c] sm:$0xf]
    %v645 = vld [vmem:[#allocation9 + $0x40] sm:$0xf]
    %v646 = vld [vmem:[#allocation9 + $0x44] sm:$0xf]
    %v647 = vld [vmem:[#allocation9 + $0x48] sm:$0xf]
    %v648 = vld [vmem:[#allocation9 + $0x4c] sm:$0xf]
    %v649 = vld [vmem:[#allocation9 + $0x50] sm:$0xf]
    %v650 = vld [vmem:[#allocation9 + $0x54] sm:$0xf]
    %v651 = vld [vmem:[#allocation9 + $0x58] sm:$0xf]
    %v652 = vld [vmem:[#allocation9 + $0x5c] sm:$0xf]
    %v653 = vld [vmem:[#allocation9 + $0x60] sm:$0xf]
    %v654 = vld [vmem:[#allocation9 + $0x64] sm:$0xf]
    %v655 = vld [vmem:[#allocation9 + $0x68] sm:$0xf]
    %v656 = vld [vmem:[#allocation9 + $0x6c] sm:$0xf]
    %v657 = vld [vmem:[#allocation9 + $0x70] sm:$0xf]
    %v658 = vld [vmem:[#allocation9 + $0x74] sm:$0xf]
    %v659 = vld [vmem:[#allocation9 + $0x78] sm:$0xf]
    %v660 = vld [vmem:[#allocation9 + $0x7c] sm:$0xf]
    %v661 = vld [vmem:[#allocation9 + $0x80] sm:$0xf]
    %v662 = vld [vmem:[#allocation9 + $0x84] sm:$0xf]
    %v663 = vld [vmem:[#allocation9 + $0x88] sm:$0xf]
    %v664 = vld [vmem:[#allocation9 + $0x8c] sm:$0xf]
    %v665 = vld [vmem:[#allocation9 + $0x90] sm:$0xf]
    %v666 = vld [vmem:[#allocation9 + $0x94] sm:$0xf]
    %v667 = vld [vmem:[#allocation9 + $0x98] sm:$0xf]
    %v668 = vld [vmem:[#allocation9 + $0x9c] sm:$0xf]
    %v669 = vld [vmem:[#allocation9 + $0xa0] sm:$0xf]
    %v670 = vld [vmem:[#allocation9 + $0xa4] sm:$0xf]
    %v671 = vld [vmem:[#allocation9 + $0xa8] sm:$0xf]
    %v672 = vld [vmem:[#allocation9 + $0xac] sm:$0xf]
    %v673 = vld [vmem:[#allocation9 + $0xb0] sm:$0xf]
    %v674 = vld [vmem:[#allocation9 + $0xb4] sm:$0xf]
    %v675 = vld [vmem:[#allocation9 + $0xb8] sm:$0xf]
    %v676 = vld [vmem:[#allocation9 + $0xbc] sm:$0xf]
    %v725 = vunpack.c.l.b16 %v629
    %v726 = vunpack.c.l.b16 %v630
    %v727 = vunpack.c.l.b16 %v631
    %v728 = vunpack.c.l.b16 %v632
    %v729 = vunpack.c.l.b16 %v633
    %v730 = vunpack.c.l.b16 %v634
    %v731 = vunpack.c.l.b16 %v635
    %v732 = vunpack.c.l.b16 %v636
    %v733 = vunpack.c.l.b16 %v637
    %v734 = vunpack.c.l.b16 %v638
    %v735 = vunpack.c.l.b16 %v639
    %v736 = vunpack.c.l.b16 %v640
    %v737 = vunpack.c.l.b16 %v641
    %v738 = vunpack.c.l.b16 %v642
    %v739 = vunpack.c.l.b16 %v643
    %v740 = vunpack.c.l.b16 %v644
    %v741 = vunpack.c.l.b16 %v645
    %v742 = vunpack.c.l.b16 %v646
    %v743 = vunpack.c.l.b16 %v647
    %v744 = vunpack.c.l.b16 %v648
    %v745 = vunpack.c.l.b16 %v649
    %v746 = vunpack.c.l.b16 %v650
    %v747 = vunpack.c.l.b16 %v651
    %v748 = vunpack.c.l.b16 %v652
    %v749 = vunpack.c.l.b16 %v653
    %v750 = vunpack.c.l.b16 %v654
    %v751 = vunpack.c.l.b16 %v655
    %v752 = vunpack.c.l.b16 %v656
    %v753 = vunpack.c.l.b16 %v657
    %v754 = vunpack.c.l.b16 %v658
    %v755 = vunpack.c.l.b16 %v659
    %v756 = vunpack.c.l.b16 %v660
    %v757 = vunpack.c.l.b16 %v661
    %v758 = vunpack.c.l.b16 %v662
    %v759 = vunpack.c.l.b16 %v663
    %v760 = vunpack.c.l.b16 %v664
    %v761 = vunpack.c.l.b16 %v665
    %v762 = vunpack.c.l.b16 %v666
    %v763 = vunpack.c.l.b16 %v667
    %v764 = vunpack.c.l.b16 %v668
    %v765 = vunpack.c.l.b16 %v669
    %v766 = vunpack.c.l.b16 %v670
    %v767 = vunpack.c.l.b16 %v671
    %v768 = vunpack.c.l.b16 %v672
    %v769 = vunpack.c.l.b16 %v673
    %v770 = vunpack.c.l.b16 %v674
    %v771 = vunpack.c.l.b16 %v675
    %v772 = vunpack.c.l.b16 %v676
    %v773 = vpack.c.b16 %v726, %v725
    %v774 = vpack.c.b16 %v728, %v727
    %v775 = vpack.c.b16 %v730, %v729
    %v776 = vpack.c.b16 %v732, %v731
    %v777 = vpack.c.b16 %v734, %v733
    %v778 = vpack.c.b16 %v736, %v735
    %v779 = vpack.c.b16 %v738, %v737
    %v780 = vpack.c.b16 %v740, %v739
    %v781 = vpack.c.b16 %v742, %v741
    %v782 = vpack.c.b16 %v744, %v743
    %v783 = vpack.c.b16 %v746, %v745
    %v784 = vpack.c.b16 %v748, %v747
    %v785 = vpack.c.b16 %v750, %v749
    %v786 = vpack.c.b16 %v752, %v751
    %v787 = vpack.c.b16 %v754, %v753
    %v788 = vpack.c.b16 %v756, %v755
    %v789 = vpack.c.b16 %v758, %v757
    %v790 = vpack.c.b16 %v760, %v759
    %v791 = vpack.c.b16 %v762, %v761
    %v792 = vpack.c.b16 %v764, %v763
    %v793 = vpack.c.b16 %v766, %v765
    %v794 = vpack.c.b16 %v768, %v767
    %v795 = vpack.c.b16 %v770, %v769
    %v796 = vpack.c.b16 %v772, %v771
    %821 = vmatprep.subr.bf16.mxu0 0
    %822 = vmatpush1.bf16.msra.mxu0 %v780
    %823 = vmatprep.subr.bf16.mxu0 0
    %824 = vmatpush1.bf16.msra.mxu0 %v779
    %825 = vmatprep.subr.bf16.mxu0 0
    %826 = vmatpush1.bf16.msra.mxu0 %v778
    %827 = vmatprep.subr.bf16.mxu0 0
    %828 = vmatpush1.bf16.msra.mxu0 %v777
    %829 = vmatprep.subr.bf16.mxu0 0
    %830 = vmatpush1.bf16.msra.mxu0 %v776
    %831 = vmatprep.subr.bf16.mxu0 0
    %832 = vmatpush1.bf16.msra.mxu0 %v775
    %833 = vmatprep.subr.bf16.mxu0 0
    %834 = vmatpush1.bf16.msra.mxu0 %v774
    %835 = vmatprep.subr.bf16.mxu0 0
    %836 = vmatpush1.bf16.msra.mxu0 %v773
    %837 = vmatprep.subr.bf16.mxu0 0
    %838 = vmatpush2.bf16.msra.mxu0 %v788
    %839 = vmatprep.subr.bf16.mxu0 0
    %840 = vmatpush2.bf16.msra.mxu0 %v787
    %841 = vmatprep.subr.bf16.mxu0 0
    %842 = vmatpush2.bf16.msra.mxu0 %v786
    %843 = vmatprep.subr.bf16.mxu0 0
    %844 = vmatpush2.bf16.msra.mxu0 %v785
    %845 = vmatprep.subr.bf16.mxu0 0
    %846 = vmatpush2.bf16.msra.mxu0 %v784
    %847 = vmatprep.subr.bf16.mxu0 0
    %848 = vmatpush2.bf16.msra.mxu0 %v783
    %849 = vmatprep.subr.bf16.mxu0 0
    %850 = vmatpush2.bf16.msra.mxu0 %v782
    %851 = vmatprep.subr.bf16.mxu0 0
    %852 = vmatpush2.bf16.msra.mxu0 %v781
    %853 = vmatprep.mubr.bf16.mxu0 %v625
    %854 = vmatmul.mubr.bf16.gmra.mxu0 %v624
    %v855 = vpop.f32.mrf.mxu0
    %v856 = vadd.f32 0.0, %v855
    %v857 = vpop.f32.mrf.mxu0
    %v858 = vpop.f32.mrf.mxu0
    %v859 = vadd.f32 0.0, %v858
    %v860 = vpop.f32.mrf.mxu0
    %861 = vdwg.mxu0
    %862 = vmatprep.subr.bf16.mxu0 0
    %863 = vmatpush1.bf16.msra.mxu0 %v796
    %864 = vmatprep.subr.bf16.mxu0 0
    %865 = vmatpush1.bf16.msra.mxu0 %v795
    %866 = vmatprep.subr.bf16.mxu0 0
    %867 = vmatpush1.bf16.msra.mxu0 %v794
    %868 = vmatprep.subr.bf16.mxu0 0
    %869 = vmatpush1.bf16.msra.mxu0 %v793
    %870 = vmatprep.subr.bf16.mxu0 0
    %871 = vmatpush1.bf16.msra.mxu0 %v792
    %872 = vmatprep.subr.bf16.mxu0 0
    %873 = vmatpush1.bf16.msra.mxu0 %v791
    %874 = vmatprep.subr.bf16.mxu0 0
    %875 = vmatpush1.bf16.msra.mxu0 %v790
    %876 = vmatprep.subr.bf16.mxu0 0
    %877 = vmatpush1.bf16.msra.mxu0 %v789
    %878 = vmatprep.subr.bf16.mxu0 0
    %879 = vmatpush2.bf16.msra.mxu0 0
    %880 = vmatprep.subr.bf16.mxu0 0
    %881 = vmatpush2.bf16.msra.mxu0 0
    %882 = vmatprep.subr.bf16.mxu0 0
    %883 = vmatpush2.bf16.msra.mxu0 0
    %884 = vmatprep.subr.bf16.mxu0 0
    %885 = vmatpush2.bf16.msra.mxu0 0
    %886 = vmatprep.subr.bf16.mxu0 0
    %887 = vmatpush2.bf16.msra.mxu0 0
    %888 = vmatprep.subr.bf16.mxu0 0
    %889 = vmatpush2.bf16.msra.mxu0 0
    %890 = vmatprep.subr.bf16.mxu0 0
    %891 = vmatpush2.bf16.msra.mxu0 0
    %892 = vmatprep.subr.bf16.mxu0 0
    %893 = vmatpush2.bf16.msra.mxu0 0
    %894 = vmatprep.mubr.bf16.mxu0 0
    %895 = vmatmul.mubr.bf16.gmra.mxu0 %v626
    %v896 = vpop.f32.mrf.mxu0
    %v897 = vadd.f32 %v856, %v896
    %v898 = vpop.f32.mrf.mxu0
    %v899 = vpop.f32.mrf.mxu0
    %v900 = vadd.f32 %v859, %v899
    %v901 = vpop.f32.mrf.mxu0
    %902 = vdwg.mxu0
    %v903 = vadd.f32 %v627, %v897
    %v904 = vadd.f32 %v628, %v900
    %905 = vst [vmem:[#allocation2] sm:$0xff] %v903
    %906 = vst [vmem:[#allocation2 + $0x8] sm:$0xff] %v904
    // Predicated region
    $region38: #{tpu_custom_call.1} parent=1 // pred_check
      %p907 = pneg %p74
    $region39: #{tpu_custom_call.1} parent=1 // pred_check_branch
      %909 = sbr.rel (%p907) target = $region41
    $region40: #{tpu_custom_call.1} parent=1 // pred_region
      %v910 = vld [vmem:[#allocation2] sm:$0xff]
      %v911 = vld [vmem:[#allocation2 + $0x8] sm:$0xff]
      %v912 = vpack.c.bf16 %v911, %v910
      %v914 = vunpack.c.l.b16 %v912
      %v915 = vunpack.c.h.b16 %v912
      %v916 = vpack.c.b16 %v914, %v914
      %v917 = vpack.c.b16 %v915, %v915
      %920 = vst [vmem:[#allocation11] sm:$0xf] %v916
      %921 = vst [vmem:[#allocation11 + $0x4] sm:$0xf] %v917
    $region41: #{tpu_custom_call.1} parent=1 // pred_fallthru
      _
    // Predicated region
    $region42: #{tpu_custom_call.1} parent=1 // pred_check
      _
    $region43: #{tpu_custom_call.1} parent=1 // pred_check_branch
      %923 = sbr.rel (0) target = $region45
    $region44: #{tpu_custom_call.1} parent=1 // pred_region
      %s925 = ssub.s32 128, 128
      %926 = vsyncadd [#allocation5], %s925
      %s927 = sshll.u32 [#allocation11], 4
      %s928 = int_to_ptr.vmem [resolvable:$true] %s927
      %933 = dma.vmem_to_hbm [thread:$0]  %s928, 128, %s4, [#allocation5], 64, 64, 4
    $region45: #{tpu_custom_call.1} parent=1 // pred_fallthru
      _
    // Predicated region
    $region46: #{tpu_custom_call.1} parent=1 // pred_check
      _
    $region47: #{tpu_custom_call.1} parent=1 // pred_check_branch
      %935 = sbr.rel (0) target = $region49
    $region48: #{tpu_custom_call.1} parent=1 // pred_region
      %936 = dma.done [#allocation5], 128
    $region49: #{tpu_custom_call.1} parent=1 // pred_fallthru
      _
    %937 = vsyncpa [#allocation4], 1
    %938 = vsyncpa [#allocation7], 1
    %939 = vsyncpa [#allocation10], 1
    %940 = vsyncpa [#allocation5], 1

</llo_original>
